<compile_context>
chip_gen: v5e
topology: v5e:2x2
jax: 0.10.0
libtpu: 0.0.40
codegen_flags: <defaults>
</compile_context>

<pallas_src>
import functools

import jax
import jax.numpy as jnp
from jax.experimental import pallas as pl
from jax.experimental.pallas import tpu as pltpu


def _round_up(x, m):
    return ((x + m - 1) // m) * m


def mlp_kernel(x_ref, w1_ref, b1_ref, w2_ref, b2_ref, o_ref):
    # fc1: bf16 @ bf16 -> f32 accumulate on the MXU.
    h = jnp.dot(x_ref[...], w1_ref[...], preferred_element_type=jnp.float32)
    # Bias + ReLU in f32 on the VPU.
    h = jnp.maximum(h + b1_ref[...], 0.0)
    # fc2: cast activations back to bf16 so the second matmul stays on the
    # MXU's native bf16 path; accumulate in f32.
    y = jnp.dot(h.astype(w2_ref.dtype), w2_ref[...],
                preferred_element_type=jnp.float32)
    o_ref[...] = (y + b2_ref[...]).astype(o_ref.dtype)


@functools.partial(jax.jit, static_argnames=("block_b",))
def simple_mlp_forward(x, w1, b1, w2, b2, *, block_b=256):
    """Fused MLP forward: relu(x @ w1 + b1) @ w2 + b2.

    x:  (B, D_in)   w1: (D_in, H)   b1: (H,)   w2: (H, D_out)   b2: (D_out,)
    Returns (B, D_out) float32.
    """
    B, D_in = x.shape
    H = w1.shape[1]
    D_out = w2.shape[1]

    # Lane-dense padding: feature dims to multiples of 128; batch to the tile.
    d_in_p = _round_up(D_in, 128)
    h_p = _round_up(H, 128)
    d_out_p = _round_up(D_out, 128)
    tm = min(block_b, _round_up(B, 8))     # batch tile (sublane-aligned)
    b_p = _round_up(B, tm)
    nb = b_p // tm

    # bf16 storage for activations / weights (halves HBM+VMEM traffic,
    # native MXU dtype); biases stay f32 for the f32 bias-add.
    x_p = jnp.zeros((b_p, d_in_p), jnp.bfloat16).at[:B, :D_in].set(
        x.astype(jnp.bfloat16))
    w1_p = jnp.zeros((d_in_p, h_p), jnp.bfloat16).at[:D_in, :H].set(
        w1.astype(jnp.bfloat16))
    w2_p = jnp.zeros((h_p, d_out_p), jnp.bfloat16).at[:H, :D_out].set(
        w2.astype(jnp.bfloat16))
    b1_p = jnp.zeros((1, h_p), jnp.float32).at[0, :H].set(b1.astype(jnp.float32))
    b2_p = jnp.zeros((1, d_out_p), jnp.float32).at[0, :D_out].set(
        b2.astype(jnp.float32))

    out_p = pl.pallas_call(
        mlp_kernel,
        out_shape=jax.ShapeDtypeStruct((b_p, d_out_p), jnp.float32),
        grid=(nb,),
        in_specs=[
            # x: one (tm, d_in_p) tile per grid step (streamed / pipelined).
            pl.BlockSpec((tm, d_in_p), lambda i: (i, 0)),
            # Weights and biases: same block for every grid step -> resident
            # in VMEM, DMA'd only once.
            pl.BlockSpec((d_in_p, h_p), lambda i: (0, 0)),
            pl.BlockSpec((1, h_p), lambda i: (0, 0)),
            pl.BlockSpec((h_p, d_out_p), lambda i: (0, 0)),
            pl.BlockSpec((1, d_out_p), lambda i: (0, 0)),
        ],
        out_specs=pl.BlockSpec((tm, d_out_p), lambda i: (i, 0)),
        compiler_params=pltpu.CompilerParams(
            # Batch tiles are independent -> shard across TCs on v7x megacore.
            dimension_semantics=("parallel",),
        ),
    )(x_p, w1_p, b1_p, w2_p, b2_p)

    return out_p[:B, :D_out]


def init_params(key, input_dim, hidden_dim, output_dim):
    """Deterministic PyTorch-Linear-style init: U(-1/sqrt(fan_in), 1/sqrt(fan_in))."""
    k1, k2, k3, k4 = jax.random.split(key, 4)
    bound1 = 1.0 / jnp.sqrt(input_dim)
    bound2 = 1.0 / jnp.sqrt(hidden_dim)
    # Stored already transposed relative to PyTorch's (out, in) convention.
    w1 = jax.random.uniform(k1, (input_dim, hidden_dim), jnp.float32, -bound1, bound1)
    b1 = jax.random.uniform(k2, (hidden_dim,), jnp.float32, -bound1, bound1)
    w2 = jax.random.uniform(k3, (hidden_dim, output_dim), jnp.float32, -bound2, bound2)
    b2 = jax.random.uniform(k4, (output_dim,), jnp.float32, -bound2, bound2)
    return w1, b1, w2, b2


def _reference(x, w1, b1, w2, b2):
    """Plain-JAX reference matching the kernel's bf16-storage / f32-accum numerics."""
    xb = x.astype(jnp.bfloat16).astype(jnp.float32)
    w1b = w1.astype(jnp.bfloat16).astype(jnp.float32)
    w2b = w2.astype(jnp.bfloat16).astype(jnp.float32)
    h = jnp.maximum(xb @ w1b + b1, 0.0)
    hb = h.astype(jnp.bfloat16).astype(jnp.float32)
    return hb @ w2b + b2


if __name__ == "__main__":
    key = jax.random.PRNGKey(0)
    kx, kp, kx2 = jax.random.split(key, 3)

    # Small shapes consistent with the original module.
    batch, input_dim, hidden_dim, output_dim = 8, 16, 32, 8
    x = jax.random.normal(kx, (batch, input_dim), jnp.float32)
    w1, b1, w2, b2 = init_params(kp, input_dim, hidden_dim, output_dim)

    out = simple_mlp_forward(x, w1, b1, w2, b2)
    out = jax.block_until_ready(out)
    ref = _reference(x, w1, b1, w2, b2)
    assert out.shape == (batch, output_dim)
    assert jnp.allclose(out, ref, atol=1e-2, rtol=1e-2)

    # Second check: larger, non-aligned batch exercises the batch grid
    # (multiple tiles, resident weights) and batch padding.
    batch2 = 300
    x2 = jax.random.normal(kx2, (batch2, input_dim), jnp.float32)
    out2 = simple_mlp_forward(x2, w1, b1, w2, b2)
    out2 = jax.block_until_ready(out2)
    ref2 = _reference(x2, w1, b1, w2, b2)
    assert out2.shape == (batch2, output_dim)
    assert jnp.allclose(out2, ref2, atol=1e-2, rtol=1e-2)

    print("KERNEL_OK")
</pallas_src>

<mosaic_0001>
module attributes {stable_mosaic.version = 11 : i64} {
  func.func @mlp_kernel(%arg0: i32, %arg1: memref<8x128xbf16, #tpu.memory_space<vmem>>, %arg2: memref<128x128xbf16, #tpu.memory_space<vmem>>, %arg3: memref<1x128xf32, #tpu.memory_space<vmem>>, %arg4: memref<128x128xbf16, #tpu.memory_space<vmem>>, %arg5: memref<1x128xf32, #tpu.memory_space<vmem>>, %arg6: memref<8x128xf32, #tpu.memory_space<vmem>>) attributes {dimension_semantics = [#tpu.dimension_semantics<parallel>], iteration_bounds = array<i64: 1>, scalar_prefetch = 0 : i64, scratch_operands = 0 : i64, tpu.core_type = #tpu.core_type<tc>, window_params = [{transform_indices = @transform_0, window_bounds = array<i64: 8, 128>}, {pipeline_mode = #tpu.pipeline_mode<synchronous>, transform_indices = @transform_1, window_bounds = array<i64: 128, 128>}, {pipeline_mode = #tpu.pipeline_mode<synchronous>, transform_indices = @transform_2, window_bounds = array<i64: 1, 128>}, {pipeline_mode = #tpu.pipeline_mode<synchronous>, transform_indices = @transform_3, window_bounds = array<i64: 128, 128>}, {pipeline_mode = #tpu.pipeline_mode<synchronous>, transform_indices = @transform_4, window_bounds = array<i64: 1, 128>}, {transform_indices = @transform_5, window_bounds = array<i64: 8, 128>}]} {
    %c0 = arith.constant 0 : index
    %c0_0 = arith.constant 0 : index
    %0 = vector.load %arg1[%c0, %c0_0] : memref<8x128xbf16, #tpu.memory_space<vmem>>, vector<8x128xbf16>
    %c0_1 = arith.constant 0 : index
    %c0_2 = arith.constant 0 : index
    %1 = vector.load %arg2[%c0_1, %c0_2] : memref<128x128xbf16, #tpu.memory_space<vmem>>, vector<128x128xbf16>
    %cst = arith.constant dense<0.000000e+00> : vector<8x128xf32>
    %2 = tpu.matmul %0, %1, %cst {dimension_numbers = #tpu.dot_dimension_numbers<[1], [0], [0], [1], [0, 0, 1, 1], [], []>} : vector<8x128xbf16>, vector<128x128xbf16>, vector<8x128xf32> -> vector<8x128xf32>
    %c0_3 = arith.constant 0 : index
    %c0_4 = arith.constant 0 : index
    %3 = vector.load %arg3[%c0_3, %c0_4] : memref<1x128xf32, #tpu.memory_space<vmem>>, vector<1x128xf32>
    %4 = vector.broadcast %3 : vector<1x128xf32> to vector<8x128xf32>
    %5 = arith.addf %2, %4 : vector<8x128xf32>
    %cst_5 = arith.constant 0.000000e+00 : f32
    %6 = vector.broadcast %cst_5 : f32 to vector<8x128xf32>
    %7 = arith.maximumf %5, %6 : vector<8x128xf32>
    %8 = arith.truncf %7 : vector<8x128xf32> to vector<8x128xbf16>
    %c0_6 = arith.constant 0 : index
    %c0_7 = arith.constant 0 : index
    %9 = vector.load %arg4[%c0_6, %c0_7] : memref<128x128xbf16, #tpu.memory_space<vmem>>, vector<128x128xbf16>
    %cst_8 = arith.constant dense<0.000000e+00> : vector<8x128xf32>
    %10 = tpu.matmul %8, %9, %cst_8 {dimension_numbers = #tpu.dot_dimension_numbers<[1], [0], [0], [1], [0, 0, 1, 1], [], []>} : vector<8x128xbf16>, vector<128x128xbf16>, vector<8x128xf32> -> vector<8x128xf32>
    %c0_9 = arith.constant 0 : index
    %c0_10 = arith.constant 0 : index
    %11 = vector.load %arg5[%c0_9, %c0_10] : memref<1x128xf32, #tpu.memory_space<vmem>>, vector<1x128xf32>
    %12 = vector.broadcast %11 : vector<1x128xf32> to vector<8x128xf32>
    %13 = arith.addf %10, %12 : vector<8x128xf32>
    %c0_11 = arith.constant 0 : index
    %c0_12 = arith.constant 0 : index
    %14 = vector.load %arg6[%c0_11, %c0_12] : memref<8x128xf32, #tpu.memory_space<vmem>>, vector<8x128xf32>
    tpu.vector_store %arg6[%c0_11, %c0_12], %13 {strides = array<i32>} : memref<8x128xf32, #tpu.memory_space<vmem>>, vector<8x128xf32>,
    return
  }
  func.func @transform_0(%arg0: i32) -> (i32, i32) {
    %c0_i32 = arith.constant 0 : i32
    %c0_i32_0 = arith.constant 0 : i32
    return %arg0, %c0_i32 : i32, i32
  }
  func.func @transform_1(%arg0: i32) -> (i32, i32) {
    %c0_i32 = arith.constant 0 : i32
    %c0_i32_0 = arith.constant 0 : i32
    %c0_i32_1 = arith.constant 0 : i32
    return %c0_i32, %c0_i32_0 : i32, i32
  }
  func.func @transform_2(%arg0: i32) -> (i32, i32) {
    %c0_i32 = arith.constant 0 : i32
    %c0_i32_0 = arith.constant 0 : i32
    %c0_i32_1 = arith.constant 0 : i32
    return %c0_i32, %c0_i32_0 : i32, i32
  }
  func.func @transform_3(%arg0: i32) -> (i32, i32) {
    %c0_i32 = arith.constant 0 : i32
    %c0_i32_0 = arith.constant 0 : i32
    %c0_i32_1 = arith.constant 0 : i32
    return %c0_i32, %c0_i32_0 : i32, i32
  }
  func.func @transform_4(%arg0: i32) -> (i32, i32) {
    %c0_i32 = arith.constant 0 : i32
    %c0_i32_0 = arith.constant 0 : i32
    %c0_i32_1 = arith.constant 0 : i32
    return %c0_i32, %c0_i32_0 : i32, i32
  }
  func.func @transform_5(%arg0: i32) -> (i32, i32) {
    %c0_i32 = arith.constant 0 : i32
    %c0_i32_0 = arith.constant 0 : i32
    return %arg0, %c0_i32 : i32, i32
  }
}

</mosaic_0001>

<llo_original>
// kernel: simple_mlp_forward.1
$region0: #{simple_mlp_forward.1}
  #allocation0 [shape = 'u32[]', space=smem, size = 0x4, offset = 0x4, fixed_abs, tag = 'smem constant byte address 0x4 - core index']
  #allocation1 [shape = 'u32[72,128]{1,0:T(1,128)}', space=vmem, size = 0x9000, scoped, tag = 'internal scratch']
  %s0 = inlined_call_operand.vmem [shape: bf16[8,128], index: 0, kind: input, shape index: {}]
  %s1 = inlined_call_operand.vmem [shape: bf16[128,128], index: 1, kind: input, shape index: {}]
  %s2 = inlined_call_operand.vmem [shape: f32[1,128], index: 2, kind: input, shape index: {}]
  %s3 = inlined_call_operand.vmem [shape: bf16[128,128], index: 3, kind: input, shape index: {}]
  %s4 = inlined_call_operand.vmem [shape: f32[1,128], index: 4, kind: input, shape index: {}]
  %s5 = inlined_call_operand.hbm [shape: f32[8,128], index: 5, kind: output, shape index: {}]
  %s6 = sld [smem:[#allocation0]]
  $region30: #{simple_mlp_forward.1} parent=0
    _
  %s8 = ssub.s32 1, %s6
  %s9 = scalar_select 0, %s8, %s6
  $region1: #{simple_mlp_forward.1} parent=0
    #allocation2 [shape = 'u8[4096]{0}', space=vmem, size = 0x1000, scoped, tag = 'output window, operand 0, single buffered']
    #allocation3 [shape = 's32[1]{0}', space=sflag, size = 0x4, scoped, tag = 'scoped memory for simple_mlp_forward.1']
    %10 = vsyncpa [#allocation3], 0
    // Predicated region
    $region2: #{simple_mlp_forward.1} parent=1 // pred_check
      _
    $region3: #{simple_mlp_forward.1} parent=1 // pred_check_branch
      %12 = sbr.rel (0) target = $region5
    $region4: #{simple_mlp_forward.1} parent=1 // pred_region
      _
    $region5: #{simple_mlp_forward.1} parent=1 // pred_fallthru
      _
    // Predicated region
    $region6: #{simple_mlp_forward.1} parent=1 // pred_check
      _
    $region7: #{simple_mlp_forward.1} parent=1 // pred_check_branch
      %14 = sbr.rel (0) target = $region9
    $region8: #{simple_mlp_forward.1} parent=1 // pred_region
      _
    $region9: #{simple_mlp_forward.1} parent=1 // pred_fallthru
      _
    // Predicated region
    $region10: #{simple_mlp_forward.1} parent=1 // pred_check
      _
    $region11: #{simple_mlp_forward.1} parent=1 // pred_check_branch
      %16 = sbr.rel (0) target = $region13
    $region12: #{simple_mlp_forward.1} parent=1 // pred_region
      _
    $region13: #{simple_mlp_forward.1} parent=1 // pred_fallthru
      _
    // Predicated region
    $region14: #{simple_mlp_forward.1} parent=1 // pred_check
      _
    $region15: #{simple_mlp_forward.1} parent=1 // pred_check_branch
      %18 = sbr.rel (0) target = $region17
    $region16: #{simple_mlp_forward.1} parent=1 // pred_region
      _
    $region17: #{simple_mlp_forward.1} parent=1 // pred_fallthru
      _
    // Predicated region
    $region18: #{simple_mlp_forward.1} parent=1 // pred_check
      _
    $region19: #{simple_mlp_forward.1} parent=1 // pred_check_branch
      %20 = sbr.rel (0) target = $region21
    $region20: #{simple_mlp_forward.1} parent=1 // pred_region
      _
    $region21: #{simple_mlp_forward.1} parent=1 // pred_fallthru
      _
    %v21 = vld [vmem:[%s0] sm:$0xf]
    %v22 = vld [vmem:[%s1] sm:$0xf]
    %v23 = vld [vmem:[%s1 + $0x4] sm:$0xf]
    %v24 = vld [vmem:[%s1 + $0x8] sm:$0xf]
    %v25 = vld [vmem:[%s1 + $0xc] sm:$0xf]
    %v26 = vld [vmem:[%s1 + $0x10] sm:$0xf]
    %v27 = vld [vmem:[%s1 + $0x14] sm:$0xf]
    %v28 = vld [vmem:[%s1 + $0x18] sm:$0xf]
    %v29 = vld [vmem:[%s1 + $0x1c] sm:$0xf]
    %v30 = vld [vmem:[%s1 + $0x20] sm:$0xf]
    %v31 = vld [vmem:[%s1 + $0x24] sm:$0xf]
    %v32 = vld [vmem:[%s1 + $0x28] sm:$0xf]
    %v33 = vld [vmem:[%s1 + $0x2c] sm:$0xf]
    %v34 = vld [vmem:[%s1 + $0x30] sm:$0xf]
    %v35 = vld [vmem:[%s1 + $0x34] sm:$0xf]
    %v36 = vld [vmem:[%s1 + $0x38] sm:$0xf]
    %v37 = vld [vmem:[%s1 + $0x3c] sm:$0xf]
    %v38 = vld [vmem:[%s2] sm:$0x1]
    %v40 = vperm.slane %v38, 0
    %v58 = vunpack.c.l.b16 %v22
    %v59 = vunpack.c.l.b16 %v23
    %v60 = vunpack.c.l.b16 %v24
    %v61 = vunpack.c.l.b16 %v25
    %v62 = vunpack.c.l.b16 %v26
    %v63 = vunpack.c.l.b16 %v27
    %v64 = vunpack.c.l.b16 %v28
    %v65 = vunpack.c.l.b16 %v29
    %v66 = vunpack.c.l.b16 %v30
    %v67 = vunpack.c.l.b16 %v31
    %v68 = vunpack.c.l.b16 %v32
    %v69 = vunpack.c.l.b16 %v33
    %v70 = vunpack.c.l.b16 %v34
    %v71 = vunpack.c.l.b16 %v35
    %v72 = vunpack.c.l.b16 %v36
    %v73 = vunpack.c.l.b16 %v37
    %v74 = vpack.c.b16 %v59, %v58
    %v75 = vpack.c.b16 %v61, %v60
    %v76 = vpack.c.b16 %v63, %v62
    %v77 = vpack.c.b16 %v65, %v64
    %v78 = vpack.c.b16 %v67, %v66
    %v79 = vpack.c.b16 %v69, %v68
    %v80 = vpack.c.b16 %v71, %v70
    %v81 = vpack.c.b16 %v73, %v72
    %90 = vmatpush.bf16.msra.mxu0 %v81
    %91 = vmatpush.bf16.msra.mxu0 %v80
    %92 = vmatpush.bf16.msra.mxu0 %v79
    %93 = vmatpush.bf16.msra.mxu0 %v78
    %94 = vmatpush.bf16.msra.mxu0 %v77
    %95 = vmatpush.bf16.msra.mxu0 %v76
    %96 = vmatpush.bf16.msra.mxu0 %v75
    %97 = vmatpush.bf16.msra.mxu0 %v74
    %98 = vmatmul.bf16.gmra.mxu0 %v21
    %v99 = vpop.f32.mrf.mxu0
    %v100 = vadd.f32 %v40, %v99
    %v101 = vpop.f32.mrf.mxu0
    %102 = vdwg.mxu0
    %v103 = vmax.f32 %v100, 0.0
    %v104 = vpack.c.bf16 %v103, %v103
    %v105 = vld [vmem:[%s3] sm:$0xf]
    %v106 = vld [vmem:[%s3 + $0x4] sm:$0xf]
    %v107 = vld [vmem:[%s3 + $0x8] sm:$0xf]
    %v108 = vld [vmem:[%s3 + $0xc] sm:$0xf]
    %v109 = vld [vmem:[%s3 + $0x10] sm:$0xf]
    %v110 = vld [vmem:[%s3 + $0x14] sm:$0xf]
    %v111 = vld [vmem:[%s3 + $0x18] sm:$0xf]
    %v112 = vld [vmem:[%s3 + $0x1c] sm:$0xf]
    %v113 = vld [vmem:[%s3 + $0x20] sm:$0xf]
    %v114 = vld [vmem:[%s3 + $0x24] sm:$0xf]
    %v115 = vld [vmem:[%s3 + $0x28] sm:$0xf]
    %v116 = vld [vmem:[%s3 + $0x2c] sm:$0xf]
    %v117 = vld [vmem:[%s3 + $0x30] sm:$0xf]
    %v118 = vld [vmem:[%s3 + $0x34] sm:$0xf]
    %v119 = vld [vmem:[%s3 + $0x38] sm:$0xf]
    %v120 = vld [vmem:[%s3 + $0x3c] sm:$0xf]
    %v121 = vld [vmem:[%s4] sm:$0x1]
    %v123 = vperm.slane %v121, 0
    %v141 = vunpack.c.l.b16 %v105
    %v142 = vunpack.c.l.b16 %v106
    %v143 = vunpack.c.l.b16 %v107
    %v144 = vunpack.c.l.b16 %v108
    %v145 = vunpack.c.l.b16 %v109
    %v146 = vunpack.c.l.b16 %v110
    %v147 = vunpack.c.l.b16 %v111
    %v148 = vunpack.c.l.b16 %v112
    %v149 = vunpack.c.l.b16 %v113
    %v150 = vunpack.c.l.b16 %v114
    %v151 = vunpack.c.l.b16 %v115
    %v152 = vunpack.c.l.b16 %v116
    %v153 = vunpack.c.l.b16 %v117
    %v154 = vunpack.c.l.b16 %v118
    %v155 = vunpack.c.l.b16 %v119
    %v156 = vunpack.c.l.b16 %v120
    %v157 = vpack.c.b16 %v142, %v141
    %v158 = vpack.c.b16 %v144, %v143
    %v159 = vpack.c.b16 %v146, %v145
    %v160 = vpack.c.b16 %v148, %v147
    %v161 = vpack.c.b16 %v150, %v149
    %v162 = vpack.c.b16 %v152, %v151
    %v163 = vpack.c.b16 %v154, %v153
    %v164 = vpack.c.b16 %v156, %v155
    %173 = vmatpush.bf16.msra.mxu0 %v164
    %174 = vmatpush.bf16.msra.mxu0 %v163
    %175 = vmatpush.bf16.msra.mxu0 %v162
    %176 = vmatpush.bf16.msra.mxu0 %v161
    %177 = vmatpush.bf16.msra.mxu0 %v160
    %178 = vmatpush.bf16.msra.mxu0 %v159
    %179 = vmatpush.bf16.msra.mxu0 %v158
    %180 = vmatpush.bf16.msra.mxu0 %v157
    %181 = vmatmul.bf16.gmra.mxu0 %v104
    %v182 = vpop.f32.mrf.mxu0
    %v183 = vadd.f32 %v123, %v182
    %v184 = vpop.f32.mrf.mxu0
    %185 = vdwg.mxu0
    %186 = vst [vmem:[#allocation2] sm:$0xff] %v183
    // Predicated region
    $region22: #{simple_mlp_forward.1} parent=1 // pred_check
      _
    $region23: #{simple_mlp_forward.1} parent=1 // pred_check_branch
      %188 = sbr.rel (0) target = $region25
    $region24: #{simple_mlp_forward.1} parent=1 // pred_region
      %190 = vsyncadd [#allocation3], 0
      %s192 = sshll.u32 [#allocation2], 4
      %s193 = int_to_ptr.vmem [resolvable:$true] %s192
      %s194 = sshll.u32 %s5, 4
      %s195 = int_to_ptr.hbm [resolvable:$true] %s194
      %197 = dma.vmem_to_hbm [thread:$0]  %s193, 128, %s195, [#allocation3]
    $region25: #{simple_mlp_forward.1} parent=1 // pred_fallthru
      _
    // Predicated region
    $region26: #{simple_mlp_forward.1} parent=1 // pred_check
      _
    $region27: #{simple_mlp_forward.1} parent=1 // pred_check_branch
      %199 = sbr.rel (0) target = $region29
    $region28: #{simple_mlp_forward.1} parent=1 // pred_region
      %201 = dma.done [#allocation3], 128
    $region29: #{simple_mlp_forward.1} parent=1 // pred_fallthru
      _
    %202 = vsyncpa [#allocation3], 1

</llo_original>
